<compile_context>
chip_gen: v6e
topology: v6e:2x2x1
jax: 0.10.0
libtpu: 0.0.40
codegen_flags: <defaults>
</compile_context>

<pallas_src>
import jax
import jax.numpy as jnp
from jax import lax
from jax.experimental import pallas as pl
from jax.experimental.pallas import tpu as pltpu


def _round_up(x, m):
    return ((x + m - 1) // m) * m


def _positional_embedding(d_model, max_len):
    """Replicates the PyTorch PositionalEmbedding buffer exactly
    (note the module's nonstandard exponent on the cos columns)."""
    pos = jnp.arange(max_len, dtype=jnp.float32)[:, None]          # (L, 1)
    i = jnp.arange(0, d_model, 2, dtype=jnp.float32)[None, :]      # (1, d/2)
    even = jnp.sin(pos / (10000.0 ** (2.0 * i / d_model)))
    odd = jnp.cos(pos / (10000.0 ** (2.0 * (i + 1.0) / d_model)))
    pe = jnp.zeros((max_len, d_model), jnp.float32)
    pe = pe.at[:, 0::2].set(even)
    pe = pe.at[:, 1::2].set(odd)
    return pe


def bert_embedding(sequence, segment_label, token_table, segment_table, pe,
                   *, block_seq=256):
    """Eval-mode forward of BERTEmbedding.

    sequence, segment_label : (B, S) int32
    token_table             : (V, E) f32 (row 0 is the padding row)
    segment_table           : (3, E) f32 (row 0 is the padding row)
    pe                      : (>=S, E) f32 positional table
    """
    B, S = sequence.shape
    V, E = token_table.shape
    N = B * S

    assert pe.shape[0] >= S and pe.shape[1] == E
    pe_s = pe[:S]

    # Segment table padded to a sublane multiple (zero rows, never read).
    seg_tab = jnp.zeros((8, E), segment_table.dtype).at[:segment_table.shape[0]].set(
        segment_table)

    # Sequence-tile size: multiple of 8 (sublane rule); with only two
    # double-buffered (ts, E) tiles + the (ts, E) gather scratch resident,
    # VMEM stays tiny even for E=768 and ts=512-1024.
    ts = min(_round_up(S, 8), _round_up(block_seq, 8))
    num_s = pl.cdiv(S, ts)

    # Token ids -> SMEM via scalar prefetch (drives the gather); segment ids as
    # a small blocked int32 stream; no pos_ids stream at all.
    seq_flat = sequence.reshape(N).astype(jnp.int32)
    seg_3d = segment_label.reshape(B, S, 1).astype(jnp.int32)

    def kernel(seq_ids, seg_ref, tok_hbm, pe_ref, seg_tab_ref, o_ref, gbuf, sem):
        b = pl.program_id(0)
        s = pl.program_id(1)
        base = b * S + s * ts

        # 1) Kick off the per-row token gather DMAs (HBM -> VMEM), all on one
        #    DMA semaphore (equal-size rows, so per-row waits account exactly).
        def start_row(r, carry):
            flat = jnp.minimum(base + r, N - 1)          # partial-tile guard
            tok_id = seq_ids[flat]
            tok_id = jnp.clip(tok_id, 0, V - 1)          # never issue an OOB DMA
            pltpu.make_async_copy(tok_hbm.at[pl.ds(tok_id, 1)],
                                  gbuf.at[pl.ds(r, 1)], sem).start()
            return carry
        lax.fori_loop(0, ts, start_row, 0)

        # 2) VPU work that does not need the gathered rows overlaps the DMAs:
        #    positional rows are a contiguous block slice; the 3-row segment
        #    lookup is three masked adds.
        seg_ids = seg_ref[0]                              # (ts, 1) int32
        pos_plus_seg = pe_ref[...]                        # (ts, E) f32
        for k in range(3):
            row = seg_tab_ref[k:k + 1, :]                 # (1, E), static slice
            mask = jnp.where(seg_ids == k, 1.0, 0.0)      # (ts, 1)
            pos_plus_seg = pos_plus_seg + mask * row

        # 3) Wait for the ts row copies, then add and store lane-dense.
        def wait_row(r, carry):
            pltpu.make_async_copy(tok_hbm.at[pl.ds(0, 1)],
                                  gbuf.at[pl.ds(r, 1)], sem).wait()
            return carry
        lax.fori_loop(0, ts, wait_row, 0)

        o_ref[0] = (gbuf[...] + pos_plus_seg).astype(o_ref.dtype)

    cost = pl.CostEstimate(
        flops=6 * N * E,
        transcendentals=0,
        bytes_accessed=2 * N * E * 4 + S * E * 4 + 8 * E * 4 + 2 * N * 4,
    )

    out = pl.pallas_call(
        kernel,
        out_shape=jax.ShapeDtypeStruct((B, S, E), jnp.float32),
        grid_spec=pltpu.PrefetchScalarGridSpec(
            num_scalar_prefetch=1,                        # seq_flat -> SMEM
            grid=(B, num_s),
            in_specs=[
                pl.BlockSpec((1, ts, 1), lambda b, s, seq: (b, s, 0)),   # seg ids
                pl.BlockSpec(memory_space=pl.ANY),                       # token table (HBM)
                pl.BlockSpec((ts, E), lambda b, s, seq: (s, 0)),         # positional rows
                pl.BlockSpec((8, E), lambda b, s, seq: (0, 0)),          # segment table
            ],
            out_specs=pl.BlockSpec((1, ts, E), lambda b, s, seq: (b, s, 0)),
            scratch_shapes=[
                pltpu.VMEM((ts, E), jnp.float32),          # gathered token rows
                pltpu.SemaphoreType.DMA(()),               # shared gather semaphore
            ],
        ),
        compiler_params=pltpu.CompilerParams(
            # TODO(synk): verify 2-TC sharding on v7x; fall back to
            # pltpu.CORE_PARALLEL on the batch axis if not sharded.
            dimension_semantics=("parallel", "parallel"),
        ),
        cost_estimate=cost,
    )(seq_flat, seg_3d, token_table, pe_s, seg_tab)

    # nn.Dropout(p=0.1) is identity in eval mode.
    return out


if __name__ == "__main__":
    batch, seq_len, vocab_size, embed_size = 2, 8, 32, 32

    key = jax.random.PRNGKey(0)
    k_tok, k_seg, k_ids, k_lab = jax.random.split(key, 4)

    # Embedding tables (padding_idx=0 -> row 0 zeroed, like nn.Embedding).
    token_table = jax.random.normal(k_tok, (vocab_size, embed_size), jnp.float32)
    token_table = token_table.at[0].set(0.0)
    segment_table = jax.random.normal(k_seg, (3, embed_size), jnp.float32)
    segment_table = segment_table.at[0].set(0.0)
    pe = _positional_embedding(embed_size, seq_len)

    sequence = jax.random.randint(k_ids, (batch, seq_len), 0, vocab_size, dtype=jnp.int32)
    segment_label = jax.random.randint(k_lab, (batch, seq_len), 0, 3, dtype=jnp.int32)

    out = bert_embedding(sequence, segment_label, token_table, segment_table, pe)
    out = jax.block_until_ready(out)

    # Plain-JAX reference (eval-mode dropout == identity).
    ref = token_table[sequence] + pe[None, :, :] + segment_table[segment_label]
    assert out.shape == (batch, seq_len, embed_size)
    assert jnp.allclose(out, ref, atol=1e-5, rtol=1e-5), float(jnp.max(jnp.abs(out - ref)))

    print("KERNEL_OK")
</pallas_src>

<mosaic_0001>
module attributes {stable_mosaic.version = 11 : i64} {
  func.func @kernel(%arg0: i32, %arg1: i32, %arg2: memref<16xi32, #tpu.memory_space<smem>>, %arg3: memref<1x8x1xi32, #tpu.memory_space<vmem>>, %arg4: memref<32x32xf32, #tpu.memory_space<any>>, %arg5: memref<8x32xf32, #tpu.memory_space<vmem>>, %arg6: memref<8x32xf32, #tpu.memory_space<vmem>>, %arg7: memref<1x8x32xf32, #tpu.memory_space<vmem>>, %arg8: memref<8x32xf32, #tpu.memory_space<vmem>>, %arg9: memref<!tpu.dma_semaphore, #tpu.memory_space<semaphore_mem>>) attributes {dimension_semantics = [#tpu.dimension_semantics<parallel>, #tpu.dimension_semantics<parallel>], iteration_bounds = array<i64: 2, 1>, scalar_prefetch = 1 : i64, scratch_operands = 2 : i64, tpu.core_type = #tpu.core_type<tc>, window_params = [{transform_indices = @transform_0, window_bounds = array<i64: 1, 8, 1>}, {}, {transform_indices = @transform_2, window_bounds = array<i64: 8, 32>}, {pipeline_mode = #tpu.pipeline_mode<synchronous>, transform_indices = @transform_3, window_bounds = array<i64: 8, 32>}, {transform_indices = @transform_4, window_bounds = array<i64: 1, 8, 32>}]} {
    %c8_i32 = arith.constant 8 : i32
    %0 = arith.muli %arg0, %c8_i32 : i32
    %c8_i32_0 = arith.constant 8 : i32
    %1 = arith.muli %arg1, %c8_i32_0 : i32
    %2 = arith.addi %0, %1 : i32
    %c0_i32 = arith.constant 0 : i32
    %c8_i32_1 = arith.constant 8 : i32
    %3 = arith.addi %c0_i32, %c8_i32_1 : i32
    %c1_i32 = arith.constant 1 : i32
    scf.for %arg10 = %c0_i32 to %3 step %c1_i32  : i32 {
      %43 = arith.addi %2, %arg10 : i32
      %c15_i32 = arith.constant 15 : i32
      %44 = arith.minsi %43, %c15_i32 : i32
      %45 = arith.index_cast %44 : i32 to index
      %46 = memref.load %arg2[%45] : memref<16xi32, #tpu.memory_space<smem>>
      %c0_i32_27 = arith.constant 0 : i32
      %c31_i32 = arith.constant 31 : i32
      %47 = arith.maxsi %c0_i32_27, %46 : i32
      %48 = arith.minsi %c31_i32, %47 : i32
      %c0_i32_28 = arith.constant 0 : i32
      %49 = tpu.memref_slice %arg4[%48, %c0_i32_28] : memref<32x32xf32, #tpu.memory_space<any>> -> memref<1x32xf32, #tpu.memory_space<any>>
      %c0_i32_29 = arith.constant 0 : i32
      %50 = tpu.memref_slice %arg8[%arg10, %c0_i32_29] : memref<8x32xf32, #tpu.memory_space<vmem>> -> memref<1x32xf32, #tpu.memory_space<vmem>>
      tpu.enqueue_dma source(%49 : memref<1x32xf32, #tpu.memory_space<any>>) target(%50 : memref<1x32xf32, #tpu.memory_space<vmem>>) target_semaphore(%arg9 : memref<!tpu.dma_semaphore, #tpu.memory_space<semaphore_mem>>)
    }
    %c8_i32_2 = arith.constant 8 : i32
    %c0 = arith.constant 0 : index
    %c0_3 = arith.constant 0 : index
    %c0_4 = arith.constant 0 : index
    %4 = vector.load %arg3[%c0, %c0_3, %c0_4] : memref<1x8x1xi32, #tpu.memory_space<vmem>>, vector<1x8x1xi32>
    %5 = vector.shape_cast %4 : vector<1x8x1xi32> to vector<8x1xi32>
    %c0_5 = arith.constant 0 : index
    %c0_6 = arith.constant 0 : index
    %6 = vector.load %arg5[%c0_5, %c0_6] : memref<8x32xf32, #tpu.memory_space<vmem>>, vector<8x32xf32>
    %c0_7 = arith.constant 0 : index
    %c0_8 = arith.constant 0 : index
    %7 = vector.load %arg6[%c0_7, %c0_8] : memref<8x32xf32, #tpu.memory_space<vmem>>, vector<1x32xf32>
    %c0_i32_9 = arith.constant 0 : i32
    %8 = vector.broadcast %c0_i32_9 : i32 to vector<8x1xi32>
    %9 = arith.cmpi eq, %5, %8 : vector<8x1xi32>
    %cst = arith.constant 1.000000e+00 : f32
    %cst_10 = arith.constant 0.000000e+00 : f32
    %10 = vector.broadcast %cst : f32 to vector<8x1xf32>
    %11 = vector.broadcast %cst_10 : f32 to vector<8x1xf32>
    %12 = arith.select %9, %10, %11 : vector<8x1xi1>, vector<8x1xf32>
    %13 = vector.broadcast %12 : vector<8x1xf32> to vector<8x32xf32>
    %14 = vector.broadcast %7 : vector<1x32xf32> to vector<8x32xf32>
    %15 = arith.mulf %13, %14 : vector<8x32xf32>
    %16 = arith.addf %6, %15 : vector<8x32xf32>
    %c1 = arith.constant 1 : index
    %c0_11 = arith.constant 0 : index
    %17 = vector.load %arg6[%c1, %c0_11] : memref<8x32xf32, #tpu.memory_space<vmem>>, vector<1x32xf32>
    %c1_i32_12 = arith.constant 1 : i32
    %18 = vector.broadcast %c1_i32_12 : i32 to vector<8x1xi32>
    %19 = arith.cmpi eq, %5, %18 : vector<8x1xi32>
    %cst_13 = arith.constant 1.000000e+00 : f32
    %cst_14 = arith.constant 0.000000e+00 : f32
    %20 = vector.broadcast %cst_13 : f32 to vector<8x1xf32>
    %21 = vector.broadcast %cst_14 : f32 to vector<8x1xf32>
    %22 = arith.select %19, %20, %21 : vector<8x1xi1>, vector<8x1xf32>
    %23 = vector.broadcast %22 : vector<8x1xf32> to vector<8x32xf32>
    %24 = vector.broadcast %17 : vector<1x32xf32> to vector<8x32xf32>
    %25 = arith.mulf %23, %24 : vector<8x32xf32>
    %26 = arith.addf %16, %25 : vector<8x32xf32>
    %c2 = arith.constant 2 : index
    %c0_15 = arith.constant 0 : index
    %27 = vector.load %arg6[%c2, %c0_15] : memref<8x32xf32, #tpu.memory_space<vmem>>, vector<1x32xf32>
    %c2_i32 = arith.constant 2 : i32
    %28 = vector.broadcast %c2_i32 : i32 to vector<8x1xi32>
    %29 = arith.cmpi eq, %5, %28 : vector<8x1xi32>
    %cst_16 = arith.constant 1.000000e+00 : f32
    %cst_17 = arith.constant 0.000000e+00 : f32
    %30 = vector.broadcast %cst_16 : f32 to vector<8x1xf32>
    %31 = vector.broadcast %cst_17 : f32 to vector<8x1xf32>
    %32 = arith.select %29, %30, %31 : vector<8x1xi1>, vector<8x1xf32>
    %33 = vector.broadcast %32 : vector<8x1xf32> to vector<8x32xf32>
    %34 = vector.broadcast %27 : vector<1x32xf32> to vector<8x32xf32>
    %35 = arith.mulf %33, %34 : vector<8x32xf32>
    %36 = arith.addf %26, %35 : vector<8x32xf32>
    %c0_i32_18 = arith.constant 0 : i32
    %c8_i32_19 = arith.constant 8 : i32
    %37 = arith.addi %c0_i32_18, %c8_i32_19 : i32
    %c1_i32_20 = arith.constant 1 : i32
    scf.for %arg10 = %c0_i32_18 to %37 step %c1_i32_20  : i32 {
      %c0_i32_27 = arith.constant 0 : i32
      %c0_i32_28 = arith.constant 0 : i32
      %43 = tpu.memref_slice %arg4[%c0_i32_27, %c0_i32_28] : memref<32x32xf32, #tpu.memory_space<any>> -> memref<1x32xf32, #tpu.memory_space<any>>
      %c0_i32_29 = arith.constant 0 : i32
      %44 = tpu.memref_slice %arg8[%arg10, %c0_i32_29] : memref<8x32xf32, #tpu.memory_space<vmem>> -> memref<1x32xf32, #tpu.memory_space<vmem>>
      tpu.wait_dma2 semaphore(%arg9 : memref<!tpu.dma_semaphore, #tpu.memory_space<semaphore_mem>>) src(%43 : memref<1x32xf32, #tpu.memory_space<any>>) dst(%44 : memref<1x32xf32, #tpu.memory_space<vmem>>)
    }
    %c8_i32_21 = arith.constant 8 : i32
    %c0_22 = arith.constant 0 : index
    %c0_23 = arith.constant 0 : index
    %38 = vector.load %arg8[%c0_22, %c0_23] : memref<8x32xf32, #tpu.memory_space<vmem>>, vector<8x32xf32>
    %39 = arith.addf %38, %36 : vector<8x32xf32>
    %c0_24 = arith.constant 0 : index
    %c0_25 = arith.constant 0 : index
    %c0_26 = arith.constant 0 : index
    %40 = vector.load %arg7[%c0_24, %c0_25, %c0_26] : memref<1x8x32xf32, #tpu.memory_space<vmem>>, vector<1x8x32xf32>
    %41 = vector.shape_cast %40 : vector<1x8x32xf32> to vector<8x32xf32>
    %42 = vector.shape_cast %39 : vector<8x32xf32> to vector<1x8x32xf32>
    tpu.vector_store %arg7[%c0_24, %c0_25, %c0_26], %42 {strides = array<i32>} : memref<1x8x32xf32, #tpu.memory_space<vmem>>, vector<1x8x32xf32>,
    return
  }
  func.func @transform_0(%arg0: i32, %arg1: i32, %arg2: memref<16xi32, #tpu.memory_space<smem>>) -> (i32, i32, i32) {
    %c0_i32 = arith.constant 0 : i32
    %c0_i32_0 = arith.constant 0 : i32
    return %arg0, %arg1, %c0_i32 : i32, i32, i32
  }
  func.func @transform_2(%arg0: i32, %arg1: i32, %arg2: memref<16xi32, #tpu.memory_space<smem>>) -> (i32, i32) {
    %c0_i32 = arith.constant 0 : i32
    %c0_i32_0 = arith.constant 0 : i32
    return %arg1, %c0_i32 : i32, i32
  }
  func.func @transform_3(%arg0: i32, %arg1: i32, %arg2: memref<16xi32, #tpu.memory_space<smem>>) -> (i32, i32) {
    %c0_i32 = arith.constant 0 : i32
    %c0_i32_0 = arith.constant 0 : i32
    %c0_i32_1 = arith.constant 0 : i32
    return %c0_i32, %c0_i32_0 : i32, i32
  }
  func.func @transform_4(%arg0: i32, %arg1: i32, %arg2: memref<16xi32, #tpu.memory_space<smem>>) -> (i32, i32, i32) {
    %c0_i32 = arith.constant 0 : i32
    %c0_i32_0 = arith.constant 0 : i32
    return %arg0, %arg1, %c0_i32 : i32, i32, i32
  }
}

</mosaic_0001>

<llo_original>
// kernel: tpu_custom_call.1
$region0: #{tpu_custom_call.1}
  #allocation0 [shape = 'u32[]', space=smem, size = 0x4, offset = 0x4, fixed_abs, tag = 'smem constant byte address 0x4 - core index']
  #allocation1 [shape = 'u32[144,128]{1,0:T(1,128)}', space=vmem, size = 0x12000, scoped, tag = 'internal scratch']
  #allocation2 [shape = 'f32[8,32]{1,0:T(8,128)}', space=vmem, size = 0x1000, scoped, tag = 'scratch operand']
  #allocation3 [shape = 's32[1]{0}', space=sflag, size = 0x4, scoped, tag = 'scratch operand']
  #allocation4 [shape = 's32[1]{0}', space=sflag, size = 0x4, scoped, tag = 'scoped memory for tpu_custom_call.1']
  #allocation5 [shape = 'u8[512]{0}', space=smem, size = 0x200, scoped, tag = 'prefetched SMEM operand 0']
  #allocation8 [shape = 's32[]', space=sflag, size = 0x4, offset = 0, fixed_abs, tag = 'sflag constant byte address 0x0 - dummy sync flag']
  #allocation9 [shape = 's32[]', space=sflag, size = 0x4, offset = 0, fixed_abs, tag = 'sflag constant byte address 0x0 - dummy sync flag']
  #allocation10 [shape = 'u32[]', space=smem, size = 0x4, offset = 0x44, fixed_abs, tag = 'smem constant byte address 0x44 - assertion arg 0']
  #allocation11 [shape = 'u32[]', space=smem, size = 0x4, offset = 0x48, fixed_abs, tag = 'smem constant byte address 0x48 - assertion arg 1']
  %s0 = inlined_call_operand.vmem [shape: s32[16], index: 0, kind: input, shape index: {}]
  %s1 = inlined_call_operand.vmem [shape: s32[2,8,1], index: 1, kind: input, shape index: {}]
  %s2 = inlined_call_operand.hbm [shape: f32[32,32], index: 2, kind: input, shape index: {}]
  %s3 = inlined_call_operand.vmem [shape: f32[8,32], index: 3, kind: input, shape index: {}]
  %s4 = inlined_call_operand.vmem [shape: f32[8,32], index: 4, kind: input, shape index: {}]
  %s5 = inlined_call_operand.hbm [shape: f32[2,8,32], index: 5, kind: output, shape index: {}]
  %s6 = sld [smem:[#allocation0]]
  $region63: #{tpu_custom_call.1} parent=0
    _
  %s8 = ssub.s32 1, %s6
  %s9 = scalar_select 0, %s8, %s6
  %s10 = sshll.u32 %s0, 4
  %s11 = int_to_ptr.vmem [resolvable:$true] %s10
  %13 = dma.vmem_to_smem %s11, 16, [#allocation5], [#allocation4]
  %14 = dma.done [#allocation4], 16
  %15 = sfence
  $region1: #{tpu_custom_call.1} parent=0
    #allocation6 [shape = 'u8[8192]{0}', space=vmem, size = 0x2000, scoped, tag = 'output window, operand 0']
    #allocation7 [shape = 's32[2]{0}', space=sflag, size = 0x8, scoped, tag = 'scoped memory for tpu_custom_call.1']
    %16 = vsyncpa [#allocation7], 0
    %s17 = scalar_lea.sflag [#allocation7], 1
    %18 = vsyncpa %s17, 0
    loop: start=0, step=1, limit=4
    $region2: #{tpu_custom_call.1} parent=1 // loop_pre_header
      _
    $region3: #{tpu_custom_call.1} parent=1 // loop_header
      %s20 = sphi 0, %s24
      %p21 = scmp.ge.s32.totalorder %s20, 4
      %s27 = sphi 0, %s39
      %s28 = sphi 0, %s35
      %s29 = sphi 0, %s27
      %s30 = sphi 0, %s28
      %s31 = sphi 0, %s29
      %s32 = sphi 0, %s30
      %s44 = sphi 0, %s46
      %s47 = sphi 0, %s44
      %s48 = sphi 0, %s47
      %s64 = sphi 0, %s48
      %s70 = sphi 0, %s72
      %s73 = sphi 0, %s70
      %s74 = sphi 0, %s73
      %s90 = sphi 0, %s74
      %s94 = sphi 0, %s94
      %s96 = sphi 0, %s94
      %s97 = sphi 0, %s96
      %s111 = sphi 0, %s97
      %s119 = sphi 0, %s121
      %s122 = sphi 0, %s119
      %s123 = sphi 0, %s122
      %s139 = sphi 0, %s123
    $region4: #{tpu_custom_call.1} parent=1 // loop_header_branch
      %23 = sbr.rel (%p21) target = $region8
    $region5: #{tpu_custom_call.1} parent=1 // loop_body
      %s25 = ssub.s32 %s20, 1
      %s26 = ssub.s32 %s20, 2
      %s33 = sadd.s32 1, %s28
      %p34 = scmp.ge.s32.totalorder %s33, 1
      %s35 = scalar_select %p34, 0, %s33
      %s36 = sadd.s32 1, %s27
      %s37 = scalar_select %p34, %s36, %s27
      %p38 = scmp.ge.s32.totalorder %s37, 2
      %s39 = scalar_select %p38, 0, %s37
      %s40 = ssub.s32 %s27, %s39
      %s41 = ssub.s32 %s28, %s35
      %s42 = sor.u32 %s40, %s41
      %p43 = scmp.eq.s32.totalorder %s42, 0
      %s45 = sadd.s32 %s44, 1
      %s46 = scalar_select %p43, %s44, %s45
      %p49 = pneg %p43
      %p50 = scmp.eq.s32.totalorder %s20, 1
      %p51 = por %p49, %p50
      %p52 = scmp.ne.s32.totalorder %s44, %s47
      %p53 = scmp.eq.s32.totalorder %s20, 0
      %p54 = por %p52, %p53
      %p55 = scmp.ne.s32.totalorder %s44, %s47
      %p56 = scmp.eq.s32.totalorder %s25, 1
      %p57 = por %p55, %p56
      %p58 = scmp.ne.s32.totalorder %s47, %s48
      %p59 = scmp.eq.s32.totalorder %s25, 0
      %p60 = por %p58, %p59
      %p61 = scmp.ne.s32.totalorder %s47, %s48
      %p62 = scmp.eq.s32.totalorder %s26, 1
      %p63 = por %p61, %p62
      %p65 = scmp.ne.s32.totalorder %s48, %s64
      %p66 = scmp.eq.s32.totalorder %s26, 0
      %p67 = por %p65, %p66
      %s68 = ssub.s32 %s28, %s35
      %p69 = scmp.eq.s32.totalorder %s68, 0
      %s71 = sadd.s32 %s70, 1
      %s72 = scalar_select %p69, %s70, %s71
      %p75 = pneg %p69
      %p76 = scmp.eq.s32.totalorder %s20, 1
      %p77 = por %p75, %p76
      %p78 = scmp.ne.s32.totalorder %s70, %s73
      %p79 = scmp.eq.s32.totalorder %s20, 0
      %p80 = por %p78, %p79
      %p81 = scmp.ne.s32.totalorder %s70, %s73
      %p82 = scmp.eq.s32.totalorder %s25, 1
      %p83 = por %p81, %p82
      %p84 = scmp.ne.s32.totalorder %s73, %s74
      %p85 = scmp.eq.s32.totalorder %s25, 0
      %p86 = por %p84, %p85
      %p87 = scmp.ne.s32.totalorder %s73, %s74
      %p88 = scmp.eq.s32.totalorder %s26, 1
      %p89 = por %p87, %p88
      %p91 = scmp.ne.s32.totalorder %s74, %s90
      %p92 = scmp.eq.s32.totalorder %s26, 0
      %p93 = por %p91, %p92
      %s95 = sadd.s32 %s94, 1
      %p98 = scmp.eq.s32.totalorder %s20, 1
      %p99 = scmp.ne.s32.totalorder %s94, %s96
      %p100 = scmp.eq.s32.totalorder %s20, 0
      %p101 = por %p99, %p100
      %p102 = scmp.ne.s32.totalorder %s94, %s96
      %p103 = scmp.eq.s32.totalorder %s25, 1
      %p104 = por %p102, %p103
      %p105 = scmp.ne.s32.totalorder %s96, %s97
      %p106 = scmp.eq.s32.totalorder %s25, 0
      %p107 = por %p105, %p106
      %p108 = scmp.ne.s32.totalorder %s96, %s97
      %p109 = scmp.eq.s32.totalorder %s26, 1
      %p110 = por %p108, %p109
      %p112 = scmp.ne.s32.totalorder %s97, %s111
      %p113 = scmp.eq.s32.totalorder %s26, 0
      %p114 = por %p112, %p113
      %s115 = ssub.s32 %s27, %s39
      %s116 = ssub.s32 %s28, %s35
      %s117 = sor.u32 %s115, %s116
      %p118 = scmp.eq.s32.totalorder %s117, 0
      %s120 = sadd.s32 %s119, 1
      %s121 = scalar_select %p118, %s119, %s120
      %p124 = pneg %p118
      %p125 = scmp.eq.s32.totalorder %s20, 1
      %p126 = por %p124, %p125
      %p127 = scmp.ne.s32.totalorder %s119, %s122
      %p128 = scmp.eq.s32.totalorder %s20, 0
      %p129 = por %p127, %p128
      %p130 = scmp.ne.s32.totalorder %s119, %s122
      %p131 = scmp.eq.s32.totalorder %s25, 1
      %p132 = por %p130, %p131
      %p133 = scmp.ne.s32.totalorder %s122, %s123
      %p134 = scmp.eq.s32.totalorder %s25, 0
      %p135 = por %p133, %p134
      %p136 = scmp.ne.s32.totalorder %s122, %s123
      %p137 = scmp.eq.s32.totalorder %s26, 1
      %p138 = por %p136, %p137
      %p140 = scmp.ne.s32.totalorder %s123, %s139
      %p141 = scmp.eq.s32.totalorder %s26, 0
      %p142 = por %p140, %p141
      %p143 = scmp.le.s32.totalorder 1, %s20
      %p144 = scmp.lt.s32.totalorder %s20, 3
      %p145 = pnand %p143, %p144
      %p146 = pneg %p145
      // Predicated region
      $region9: #{tpu_custom_call.1} parent=5 // pred_check
        _
      $region10: #{tpu_custom_call.1} parent=5 // pred_check_branch
        %148 = sbr.rel (%p145) target = $region12
      $region11: #{tpu_custom_call.1} parent=5 // pred_region
        %s149 = ssub.s32 %s20, 1
        // Predicated region
        $region13: #{tpu_custom_call.1} parent=11 // pred_check
          %p150 = pneg %p86
        $region14: #{tpu_custom_call.1} parent=11 // pred_check_branch
          %152 = sbr.rel (%p150) target = $region16
        $region15: #{tpu_custom_call.1} parent=11 // pred_region
          %p153 = scmp.lt.s32.totalorder %s30, 0
          %s154 = scalar_select %p153, %s30, 0
          %s155 = smul.addr %s154, 8
          %s156 = scalar_lea.vmem %s3, %s155
        $region16: #{tpu_custom_call.1} parent=11 // pred_fallthru
          _
        // Predicated region
        $region17: #{tpu_custom_call.1} parent=11 // pred_check
          %p157 = pneg %p107
        $region18: #{tpu_custom_call.1} parent=11 // pred_check_branch
          %159 = sbr.rel (%p157) target = $region20
        $region19: #{tpu_custom_call.1} parent=11 // pred_region
          _
        $region20: #{tpu_custom_call.1} parent=11 // pred_fallthru
          _
      $region12: #{tpu_custom_call.1} parent=5 // pred_fallthru
        _
      %p160 = scmp.lt.s32.totalorder %s20, 2
      // Predicated region
      $region21: #{tpu_custom_call.1} parent=5 // pred_check
        %p161 = pneg %p160
      $region22: #{tpu_custom_call.1} parent=5 // pred_check_branch
        %163 = sbr.rel (%p161) target = $region24
      $region23: #{tpu_custom_call.1} parent=5 // pred_region
        // Predicated region
        $region25: #{tpu_custom_call.1} parent=23 // pred_check
          %p164 = pneg %p54
        $region26: #{tpu_custom_call.1} parent=23 // pred_check_branch
          %166 = sbr.rel (%p164) target = $region28
        $region27: #{tpu_custom_call.1} parent=23 // pred_region
          %p167 = scmp.lt.s32.totalorder %s27, 1
          %s168 = scalar_select %p167, %s27, 1
          %p169 = scmp.lt.s32.totalorder %s28, 0
          %s170 = scalar_select %p169, %s28, 0
          %s171 = sadd.s32 %s170, %s168
          %s172 = smul.addr %s171, 8
          %s173 = scalar_lea.vmem %s1, %s172
        $region28: #{tpu_custom_call.1} parent=23 // pred_fallthru
          _
      $region24: #{tpu_custom_call.1} parent=5 // pred_fallthru
        _
      %p174 = scmp.le.s32.totalorder 1, %s20
      %p175 = scmp.lt.s32.totalorder %s20, 3
      %p176 = pnand %p174, %p175
      %p177 = pneg %p176
      // Predicated region
      $region29: #{tpu_custom_call.1} parent=5 // pred_check
        _
      $region30: #{tpu_custom_call.1} parent=5 // pred_check_branch
        %179 = sbr.rel (%p176) target = $region32
      $region31: #{tpu_custom_call.1} parent=5 // pred_region
        %s180 = ssub.s32 %s20, 1
        %p181 = scmp.lt.s32.totalorder %s29, 1
        %s182 = scalar_select %p181, %s29, 1
        %p183 = scmp.lt.s32.totalorder %s30, 0
        %s184 = scalar_select %p183, %s30, 0
        %s185 = sadd.s32 %s184, %s182
        %s186 = smul.addr %s185, 8
        %s187 = scalar_lea.vmem %s1, %s186
        %p188 = pneg %p60
        %p189 = pneg %p57
        %p190 = scmp.lt.s32.totalorder %s30, 0
        %s191 = scalar_select %p190, %s30, 0
        %s192 = smul.addr %s191, 8
        %s193 = scalar_lea.vmem %s3, %s192
        %p194 = pneg %p86
        %p195 = pneg %p83
        %p196 = pneg %p107
        %p197 = pneg %p104
        %p198 = pneg %p135
        %p199 = pneg %p132
        %s200 = sand.u32 %s122, 1
        %s201 = scalar_lea.sflag [#allocation7], %s200
        %s202 = sand.u32 %s122, 1
        %s203 = smul.addr %s202, 8
        %s204 = scalar_lea.vmem [#allocation6], %s203
        %p205 = scmp.lt.s32.totalorder %s29, 1
        %s206 = scalar_select %p205, %s29, 1
        %p207 = scmp.lt.s32.totalorder %s30, 0
        %s208 = scalar_select %p207, %s30, 0
        %s209 = sadd.s32 %s208, %s206
        %s210 = smul.addr %s209, 8
        %s211 = scalar_lea.vmem %s1, %s210
        %p212 = scmp.lt.s32.totalorder %s30, 0
        %s213 = scalar_select %p212, %s30, 0
        %s214 = smul.addr %s213, 8
        %s215 = scalar_lea.vmem %s3, %s214
        %s216 = smul.u32 %s29, 8
        %s217 = smul.u32 %s30, 8
        %s218 = sadd.s32 %s216, %s217
        loop: start=0, step=1, limit=8
        $region33: #{tpu_custom_call.1} parent=31 // loop_pre_header
          _
        $region34: #{tpu_custom_call.1} parent=31 // loop_header
          %s220 = sphi 0, %s224
          %p221 = scmp.ge.s32.totalorder %s220, 8
        $region35: #{tpu_custom_call.1} parent=31 // loop_header_branch
          %223 = sbr.rel (%p221) target = $region39
        $region36: #{tpu_custom_call.1} parent=31 // loop_body
          %s225 = sadd.s32 %s218, %s220
          %p226 = scmp.lt.s32.totalorder %s225, 15
          %s227 = scalar_select %p226, %s225, 15
          %s228 = sld [smem:[#allocation5 + %s227]]
          %p229 = scmp.gt.s32.totalorder %s228, 0
          %s230 = scalar_select %p229, %s228, 0
          %p231 = scmp.lt.s32.totalorder %s230, 31
          %s232 = scalar_select %p231, %s230, 31
          %s233 = smul.addr %s232, 16
          %s234 = scalar_lea.hbm %s2, %s233
          %s235 = scalar_lea.vmem [#allocation2], %s220
          // Predicated region
          $region40: #{tpu_custom_call.1} parent=36 // pred_check
            _
          $region41: #{tpu_custom_call.1} parent=36 // pred_check_branch
            %237 = sbr.rel target = $region43
          $region42: #{tpu_custom_call.1} parent=36 // pred_region
            %238 = sst [smem:[#allocation10]] [#allocation9]
            %239 = sst [smem:[#allocation11]] [#allocation8]
          $region43: #{tpu_custom_call.1} parent=36 // pred_fallthru
            _
          %241 = shalt.err (0)
          %s243 = sshll.u32 %s235, 4
          %s244 = int_to_ptr.vmem [resolvable:$true] %s243
          %246 = dma.hbm_to_vmem [thread:$0]  %s234, 16, %s244, [#allocation3]
        $region37: #{tpu_custom_call.1} parent=31 // loop_footer
          %s224 = sadd.s32 1, %s220
        $region38: #{tpu_custom_call.1} parent=31 // loop_footer_branch
          %219 = sbr.rel target = $region34
        $region39: #{tpu_custom_call.1} parent=31 // loop_exit
          _
        %v247 = vld [vmem:[%s211] sm:$0xff]
        %v248 = vld [vmem:[%s215] sm:$0xff]
        %v249 = vld [vmem:[%s4] sm:$0x1]
        %vm250 = vcmp.eq.s32.totalorder %v247, 0
        %v251 = vsel %vm250, 1.0, 0.0
        %253 = vset.pattern.permute.xlu0 0
        %254 = vperm.xlu0 %253, %v251
        %v255 = vpop.permute.xlu0 %254
        %v257 = vlaneseq
        %v258 = vshrl.u32 %v257, 7
        %v259 = vsub.s32 0, %v258
        %v260 = vrot.slane %v249, %v259
        %v261 = vmul.f32 %v255, %v260
        %v262 = vadd.f32 %v248, %v261
        %v263 = vld [vmem:[%s4 + $0x1] sm:$0x1]
        %vm264 = vcmp.eq.s32.totalorder %v247, 1
        %v265 = vsel %vm264, 1.0, 0.0
        %267 = vset.pattern.permute.xlu0 0
        %268 = vperm.xlu0 %267, %v265
        %v269 = vpop.permute.xlu0 %268
        %v271 = vlaneseq
        %v272 = vshrl.u32 %v271, 7
        %v273 = vsub.s32 0, %v272
        %v274 = vrot.slane %v263, %v273
        %v275 = vmul.f32 %v269, %v274
        %v276 = vadd.f32 %v262, %v275
        %v277 = vld [vmem:[%s4 + $0x2] sm:$0x1]
        %vm278 = vcmp.eq.s32.totalorder %v247, 2
        %v279 = vsel %vm278, 1.0, 0.0
        %281 = vset.pattern.permute.xlu0 0
        %282 = vperm.xlu0 %281, %v279
        %v283 = vpop.permute.xlu0 %282
        %v285 = vlaneseq
        %v286 = vshrl.u32 %v285, 7
        %v287 = vsub.s32 0, %v286
        %v288 = vrot.slane %v277, %v287
        %v289 = vmul.f32 %v283, %v288
        %v290 = vadd.f32 %v276, %v289
        loop: start=0, step=1, limit=8
        $region44: #{tpu_custom_call.1} parent=31 // loop_pre_header
          _
        $region45: #{tpu_custom_call.1} parent=31 // loop_header
          %s292 = sphi 0, %s296
          %p293 = scmp.ge.s32.totalorder %s292, 8
        $region46: #{tpu_custom_call.1} parent=31 // loop_header_branch
          %295 = sbr.rel (%p293) target = $region50
        $region47: #{tpu_custom_call.1} parent=31 // loop_body
          %s297 = smul.u32 1, 1
          %s298 = sshll.u32 %s297, 4
          %299 = dma.done [#allocation3], %s298
        $region48: #{tpu_custom_call.1} parent=31 // loop_footer
          %s296 = sadd.s32 1, %s292
        $region49: #{tpu_custom_call.1} parent=31 // loop_footer_branch
          %291 = sbr.rel target = $region45
        $region50: #{tpu_custom_call.1} parent=31 // loop_exit
          _
        %v300 = vld [vmem:[#allocation2] sm:$0xff]
        %v301 = vadd.f32 %v300, %v290
        %vm302 = vcmask 261120
        %303 = vst.msk [vmem:[%s204] sm:$0xff] %vm302, %v301
        %s304 = sand.u32 %s122, 1
        %s305 = scalar_lea.sflag [#allocation7], %s304
        %s306 = sand.u32 %s122, 1
        %s307 = smul.addr %s306, 8
        %s308 = scalar_lea.vmem [#allocation6], %s307
        // Predicated region
        $region51: #{tpu_custom_call.1} parent=31 // pred_check
          %p309 = pneg %p132
        $region52: #{tpu_custom_call.1} parent=31 // pred_check_branch
          %311 = sbr.rel (%p309) target = $region54
        $region53: #{tpu_custom_call.1} parent=31 // pred_region
          %s313 = ssub.s32 128, 128
          %314 = vsyncadd %s305, %s313
          %s315 = sadd.s32 %s30, %s29
          %s316 = smul.addr %s315, 128
          %s317 = scalar_lea.hbm %s5, %s316
          %s319 = sshll.u32 %s308, 4
          %s320 = int_to_ptr.vmem [resolvable:$true] %s319
          %322 = dma.vmem_to_hbm [thread:$0]  %s320, 128, %s317, %s305
        $region54: #{tpu_custom_call.1} parent=31 // pred_fallthru
          _
      $region32: #{tpu_custom_call.1} parent=5 // pred_fallthru
        _
      %p323 = scmp.le.s32.totalorder 2, %s20
      // Predicated region
      $region55: #{tpu_custom_call.1} parent=5 // pred_check
        %p324 = pneg %p323
      $region56: #{tpu_custom_call.1} parent=5 // pred_check_branch
        %326 = sbr.rel (%p324) target = $region58
      $region57: #{tpu_custom_call.1} parent=5 // pred_region
        %s327 = ssub.s32 %s20, 2
        // Predicated region
        $region59: #{tpu_custom_call.1} parent=57 // pred_check
          %p328 = pneg %p138
        $region60: #{tpu_custom_call.1} parent=57 // pred_check_branch
          %330 = sbr.rel (%p328) target = $region62
        $region61: #{tpu_custom_call.1} parent=57 // pred_region
          %s331 = sand.u32 %s123, 1
          %s332 = scalar_lea.sflag [#allocation7], %s331
          %s333 = sand.u32 %s123, 1
          %s334 = smul.addr %s333, 8
          %s335 = scalar_lea.vmem [#allocation6], %s334
          %336 = dma.done %s332, 128
        $region62: #{tpu_custom_call.1} parent=57 // pred_fallthru
          _
      $region58: #{tpu_custom_call.1} parent=5 // pred_fallthru
        _
    $region6: #{tpu_custom_call.1} parent=1 // loop_footer
      %s24 = sadd.s32 1, %s20
    $region7: #{tpu_custom_call.1} parent=1 // loop_footer_branch
      %19 = sbr.rel target = $region3
    $region8: #{tpu_custom_call.1} parent=1 // loop_exit
      _
    %337 = vsyncpa [#allocation7], 1
    %s338 = scalar_lea.sflag [#allocation7], 1
    %339 = vsyncpa %s338, 1
  %340 = vsyncmov [#allocation3]
  %s341 = vpop.sfrf %340
  %p342 = scmp.eq.s32.totalorder %s341, 0
  %p343 = pneg %p342
  %345 = shalt.err (%p343)

</llo_original>
